<compile_context>
chip_gen: v5e
topology: v5e:2x2
jax: 0.10.0
libtpu: 0.0.40
codegen_flags: <defaults>
</compile_context>

<pallas_src>
import jax
import jax.numpy as jnp
from jax.experimental import pallas as pl
from jax.experimental.pallas import tpu as pltpu


# --------------------------------------------------------------------------- #
# Tiling helpers
# --------------------------------------------------------------------------- #
def _round_up(x, m):
    return ((x + m - 1) // m) * m


def _pick_tile(dim, cap, align):
    """Tile size: a multiple of `align`, at most max(cap, align).

    Never falls back to the raw full dim; callers zero-pad instead, so ragged
    dims (e.g. vocab 50257) cannot blow past VMEM with whole-array blocks.
    """
    if dim <= cap:
        return _round_up(dim, align)
    return max(align, (cap // align) * align)


def _pick_row_tile(T, cap, align=16):
    """Row tile: multiple of 16 (bf16 packs two rows per sublane); prefer at
    least 2 row tiles so the 'parallel' i axis can use both v7x TensorCores."""
    tm = _pick_tile(T, cap, align)
    Tp = _round_up(T, align)
    if Tp // tm < 2 and Tp >= 2 * align:
        tm = max(align, (Tp // 2 // align) * align)
    return tm


def _pad_to(arr, shape):
    pads = [(0, t - s) for s, t in zip(arr.shape, shape)]
    if any(p for _, p in pads):
        return jnp.pad(arr, pads)
    return arr


def _spec(shape, index_map, buffers=None):
    if buffers is None:
        return pl.BlockSpec(shape, index_map)
    return pl.BlockSpec(shape, index_map, pipeline_mode=pl.Buffered(buffers))


# --------------------------------------------------------------------------- #
# Fused MLP + LM-head kernel
# --------------------------------------------------------------------------- #
def _fused_mlp_lm_head_kernel(x_ref, w1_ref, b1_ref, w2_ref, b2_ref,
                              out_ref, h_ref, acc_ref):
    """out = gelu(x @ W1 + b1) @ W2 + b2, tiled over (row i, vocab j, K k)."""
    j = pl.program_id(1)          # vocab tile
    k = pl.program_id(2)          # hidden (K) tile of the LM-head contraction

    # Compute THIS K-slice of h = gelu(x @ W1[:, k] + b1[k]) once per row tile
    # (at j == 0) and cache it as bf16 in VMEM; vocab tiles j > 0 reuse it.
    # TODO(synk): PyTorch nn.GELU defaults to exact erf; we use jax.nn.gelu's
    # tanh approximation (EUP-friendly).  Swap in an erf gelu for exact parity.
    @pl.when(j == 0)
    def _():
        h = jnp.dot(x_ref[...], w1_ref[...],
                    preferred_element_type=jnp.float32)
        h = jax.nn.gelu(h + b1_ref[...])          # f32 elementwise math
        h_ref[k] = h.astype(h_ref.dtype)          # bf16 for the MXU

    # Init the f32 accumulator at the start of the K reduction.
    @pl.when(k == 0)
    def _():
        acc_ref[...] = jnp.zeros_like(acc_ref)

    # Accumulate this K slice of the LM head (bf16 in, f32 accumulate).
    acc_ref[...] += jnp.dot(h_ref[k], w2_ref[...],
                            preferred_element_type=jnp.float32)

    # Finalize: add output bias once, lane-dense writeback.
    @pl.when(k == pl.num_programs(2) - 1)
    def _():
        out_ref[...] = (acc_ref[...] + b2_ref[...]).astype(out_ref.dtype)


def lm_logits_pallas(x, w1, b1, w2, b2, *, tm=512, tn=512, tk=1024,
                     out_dtype=jnp.bfloat16, w2_buffers=None,
                     vmem_limit_bytes=None):
    """logits = gelu(x @ W1 + b1) @ W2 + b2, tiled for TPU.

    x:  (T, H)  bf16 token activations
    w1: (H, Hk) bf16,  b1: (1, Hk) f32
    w2: (Hk, V) bf16,  b2: (1, V)  f32
    returns (T, V) logits in out_dtype (bf16 by default to halve writeback).

    Per-generation tm guidance (W2 roofline crossover): v5e ~256, v7x ~384+,
    v6e ~768-1024 when T allows.  Default 512 is a reasonable middle ground.
    """
    T, H = x.shape
    H2, Hk = w1.shape
    Hk2, V = w2.shape
    assert H2 == H and Hk2 == Hk
    assert b1.shape == (1, Hk) and b2.shape == (1, V)

    tm = _pick_row_tile(T, tm)            # row tile, multiple of 16 (bf16 rows)
    tn = _pick_tile(V, tn, 128)           # vocab tile (lane dim)
    tk = _pick_tile(Hk, tk, 128)          # LM-head K tile (large -> few acc RMWs)

    Tp = _round_up(T, tm)
    Vp = _round_up(V, tn)
    Hkp = _round_up(Hk, tk)
    nk = Hkp // tk
    grid = (Tp // tm, Vp // tn, nk)

    # Zero-pad ragged dims to tile multiples (padded rows/cols contribute
    # nothing and are sliced off below).
    # TODO(synk): pre-pad the weights once at parameter-load time instead of
    # per call to avoid the extra HBM copies under jit.
    xp = _pad_to(x, (Tp, H))
    w1p = _pad_to(w1, (H, Hkp))
    b1p = _pad_to(b1, (1, Hkp))
    w2p = _pad_to(w2, (Hkp, Vp))
    b2p = _pad_to(b2, (1, Vp))

    # W1 / b1 are only read at j == 0; collapse their block index to slice 0
    # for j > 0 so they are DMA'd once per row tile instead of once per (j, k).
    w1_map = lambda i, j, k: (0, jnp.where(j == 0, k, 0))

    # VMEM limit: ~3/4 of the chip's physical VMEM (96 MiB on v5e/v6e,
    # 48 MiB on v7x), clamped to a sane range.
    if vmem_limit_bytes is None:
        try:
            cap = pltpu.get_tpu_info().vmem_capacity_bytes
        except Exception:
            cap = 64 * 1024 * 1024
        vmem_limit_bytes = int(min(max(cap * 3 // 4, 32 << 20), 112 << 20))

    n_i = Tp // tm
    out_isz = jnp.dtype(out_dtype).itemsize
    cost = pl.CostEstimate(
        flops=2 * Tp * H * Hkp + 2 * Tp * Hkp * Vp,
        transcendentals=Tp * Hkp,                   # gelu(tanh) per element
        bytes_accessed=(
            Tp * H * xp.dtype.itemsize                              # x once/row tile
            + n_i * (H * Hkp * w1p.dtype.itemsize                   # W1 once/row tile
                     + Hkp * b1p.dtype.itemsize)
            + n_i * (Hkp * Vp * w2p.dtype.itemsize                  # W2 streamed /row tile
                     + Vp * b2p.dtype.itemsize)
            + Tp * Vp * out_isz                                     # logits writeback
        ),
    )

    out = pl.pallas_call(
        _fused_mlp_lm_head_kernel,
        out_shape=jax.ShapeDtypeStruct((Tp, Vp), out_dtype),
        grid_spec=pltpu.PrefetchScalarGridSpec(
            num_scalar_prefetch=0,
            grid=grid,
            in_specs=[
                # Row tile of activations; constant over (j, k) -> one DMA/row tile.
                pl.BlockSpec((tm, H), lambda i, j, k: (i, 0)),
                # W1 column slices + b1 slices, streamed only while j == 0.
                pl.BlockSpec((H, tk), w1_map),
                pl.BlockSpec((1, tk), w1_map),
                # LM-head weight / bias tiles (pipelined over j, k).
                _spec((tk, tn), lambda i, j, k: (k, j), w2_buffers),
                _spec((1, tn), lambda i, j, k: (0, j), w2_buffers),
            ],
            out_specs=pl.BlockSpec((tm, tn), lambda i, j, k: (i, j)),
            scratch_shapes=[
                pltpu.VMEM((nk, tm, tk), jnp.bfloat16),   # cached gelu(x@W1+b1)
                pltpu.VMEM((tm, tn), jnp.float32),        # LM-head accumulator
            ],
        ),
        compiler_params=pltpu.CompilerParams(
            # i is safe to shard across TensorCores; j/k carry scratch state.
            dimension_semantics=("parallel", "arbitrary", "arbitrary"),
            vmem_limit_bytes=vmem_limit_bytes,
        ),
        cost_estimate=cost,
    )(xp, w1p, b1p, w2p, b2p)

    if (Tp, Vp) != (T, V):
        out = out[:T, :V]
    return out


# --------------------------------------------------------------------------- #
# EditableModel.forward equivalent
# --------------------------------------------------------------------------- #
class EditableModelJAX:
    """JAX/Pallas equivalent of EditableModel.forward: _logits(model(inputs))."""

    def __init__(self, params, *, tile_m=512, tile_n=512, tile_k=1024,
                 out_dtype=jnp.bfloat16):
        self.params = params
        self.tile_m = tile_m
        self.tile_n = tile_n
        self.tile_k = tile_k
        self.out_dtype = out_dtype

    def __call__(self, input_ids):
        B, S = input_ids.shape
        # Glue: embedding lookup in plain JAX (bf16 rows).
        # TODO(synk): fuse this gather into the kernel via
        # PrefetchScalarGridSpec(num_scalar_prefetch=1) + pl.Element row maps
        # to avoid materializing x = (B*S, H) in HBM (most valuable on v5e).
        x = jnp.take(self.params["embedding"], input_ids.reshape(-1), axis=0)
        logits_flat = lm_logits_pallas(
            x,
            self.params["w1"], self.params["b1"],
            self.params["w2"], self.params["b2"],
            tm=self.tile_m, tn=self.tile_n, tk=self.tile_k,
            out_dtype=self.out_dtype,
        )                                                  # (B*S, V)
        V = self.params["w2"].shape[1]
        # _logits(...) on a raw tensor is the identity (no .logits attribute).
        return logits_flat.reshape(B, S, V)


def make_params(key, vocab=1024, hidden=256):
    k0, k1, k2, k3, k4 = jax.random.split(key, 5)
    return {
        "embedding": (jax.random.normal(k0, (vocab, hidden)) * 0.02
                      ).astype(jnp.bfloat16),
        "w1": (jax.random.normal(k1, (hidden, hidden)) * 0.1).astype(jnp.bfloat16),
        "b1": (jax.random.normal(k2, (1, hidden)) * 0.05).astype(jnp.float32),
        "w2": (jax.random.normal(k3, (hidden, vocab)) * 0.1).astype(jnp.bfloat16),
        "b2": (jax.random.normal(k4, (1, vocab)) * 0.05).astype(jnp.float32),
    }


if __name__ == "__main__":
    # TODO(synk): EditableModel.edit / edit_loss_fn (masked_log_probs) /
    # base_loss are training utilities outside forward(); not implemented.
    # TODO(synk): int8 (v5e/v6e) / fp8 (v7x) W2 quantization with per-column
    # dequant at the finalize step for the memory-bound decode regime.
    key = jax.random.PRNGKey(0)
    pkey, dkey = jax.random.split(key)

    VOCAB, HIDDEN, B, S = 1024, 256, 2, 16
    params = make_params(pkey, vocab=VOCAB, hidden=HIDDEN)
    # Small explicit tiles so the toy shapes still exercise the full 3-D grid:
    # (row tiles, vocab tiles, K tiles) = (2, 4, 2).
    model = EditableModelJAX(params, tile_m=16, tile_n=256, tile_k=128)

    input_ids = jax.random.randint(dkey, (B, S), 0, VOCAB, dtype=jnp.int32)

    logits = model(input_ids)
    jax.block_until_ready(logits)

    # Pure-JAX reference replicating the kernel's bf16-in / f32-accumulate math.
    x = jnp.take(params["embedding"], input_ids.reshape(-1), axis=0)
    h = jnp.dot(x, params["w1"], preferred_element_type=jnp.float32) + params["b1"]
    h = jax.nn.gelu(h).astype(jnp.bfloat16)
    ref = jnp.dot(h, params["w2"], preferred_element_type=jnp.float32) + params["b2"]
    ref = ref.reshape(B, S, VOCAB)

    assert logits.shape == (B, S, VOCAB)
    assert logits.dtype == jnp.bfloat16
    logits_f32 = logits.astype(jnp.float32)
    err = float(jnp.max(jnp.abs(logits_f32 - ref)))
    assert jnp.allclose(logits_f32, ref, atol=1e-2, rtol=5e-2), err

    print("KERNEL_OK")
</pallas_src>

<mosaic_0001>
module attributes {stable_mosaic.version = 11 : i64} {
  func.func @_fused_mlp_lm_head_kernel(%arg0: i32, %arg1: i32, %arg2: i32, %arg3: memref<16x256xbf16, #tpu.memory_space<vmem>>, %arg4: memref<256x128xbf16, #tpu.memory_space<vmem>>, %arg5: memref<1x128xf32, #tpu.memory_space<vmem>>, %arg6: memref<128x256xbf16, #tpu.memory_space<vmem>>, %arg7: memref<1x256xf32, #tpu.memory_space<vmem>>, %arg8: memref<16x256xbf16, #tpu.memory_space<vmem>>, %arg9: memref<2x16x128xbf16, #tpu.memory_space<vmem>>, %arg10: memref<16x256xf32, #tpu.memory_space<vmem>>) attributes {dimension_semantics = [#tpu.dimension_semantics<parallel>, #tpu.dimension_semantics<arbitrary>, #tpu.dimension_semantics<arbitrary>], iteration_bounds = array<i64: 2, 4, 2>, scalar_prefetch = 0 : i64, scratch_operands = 2 : i64, tpu.core_type = #tpu.core_type<tc>, window_params = [{transform_indices = @transform_0, window_bounds = array<i64: 16, 256>}, {transform_indices = @transform_1, window_bounds = array<i64: 256, 128>}, {transform_indices = @transform_2, window_bounds = array<i64: 1, 128>}, {transform_indices = @transform_3, window_bounds = array<i64: 128, 256>}, {transform_indices = @transform_4, window_bounds = array<i64: 1, 256>}, {transform_indices = @transform_5, window_bounds = array<i64: 16, 256>}]} {
    %c0_i32 = arith.constant 0 : i32
    %0 = arith.cmpi eq, %arg1, %c0_i32 : i32
    %1 = arith.extui %0 : i1 to i32
    %c0_i32_0 = arith.constant 0 : i32
    %2 = arith.cmpi ne, %1, %c0_i32_0 : i32
    scf.if %2 {
      %c0_11 = arith.constant 0 : index
      %c0_12 = arith.constant 0 : index
      %17 = vector.load %arg3[%c0_11, %c0_12] : memref<16x256xbf16, #tpu.memory_space<vmem>>, vector<16x256xbf16>
      %c0_13 = arith.constant 0 : index
      %c0_14 = arith.constant 0 : index
      %18 = vector.load %arg4[%c0_13, %c0_14] : memref<256x128xbf16, #tpu.memory_space<vmem>>, vector<256x128xbf16>
      %cst_15 = arith.constant dense<0.000000e+00> : vector<16x128xf32>
      %19 = tpu.matmul %17, %18, %cst_15 {dimension_numbers = #tpu.dot_dimension_numbers<[1], [0], [0], [1], [0, 0, 1, 1], [], []>} : vector<16x256xbf16>, vector<256x128xbf16>, vector<16x128xf32> -> vector<16x128xf32>
      %c0_16 = arith.constant 0 : index
      %c0_17 = arith.constant 0 : index
      %20 = vector.load %arg5[%c0_16, %c0_17] : memref<1x128xf32, #tpu.memory_space<vmem>>, vector<1x128xf32>
      %21 = vector.broadcast %20 : vector<1x128xf32> to vector<16x128xf32>
      %22 = arith.addf %19, %21 : vector<16x128xf32>
      %23 = arith.mulf %22, %22 : vector<16x128xf32>
      %24 = arith.mulf %22, %23 : vector<16x128xf32>
      %cst_18 = arith.constant 4.471500e-02 : f32
      %25 = vector.broadcast %cst_18 : f32 to vector<16x128xf32>
      %26 = arith.mulf %25, %24 : vector<16x128xf32>
      %27 = arith.addf %22, %26 : vector<16x128xf32>
      %cst_19 = arith.constant 0.797884583 : f32
      %28 = vector.broadcast %cst_19 : f32 to vector<16x128xf32>
      %29 = arith.mulf %28, %27 : vector<16x128xf32>
      %30 = math.tanh %29 : vector<16x128xf32>
      %cst_20 = arith.constant 1.000000e+00 : f32
      %31 = vector.broadcast %cst_20 : f32 to vector<16x128xf32>
      %32 = arith.addf %31, %30 : vector<16x128xf32>
      %cst_21 = arith.constant 5.000000e-01 : f32
      %33 = vector.broadcast %cst_21 : f32 to vector<16x128xf32>
      %34 = arith.mulf %33, %32 : vector<16x128xf32>
      %35 = arith.mulf %22, %34 : vector<16x128xf32>
      %36 = arith.truncf %35 : vector<16x128xf32> to vector<16x128xbf16>
      %37 = arith.index_cast %arg2 : i32 to index
      %c0_22 = arith.constant 0 : index
      %c0_23 = arith.constant 0 : index
      %38 = vector.load %arg9[%37, %c0_22, %c0_23] : memref<2x16x128xbf16, #tpu.memory_space<vmem>>, vector<1x16x128xbf16>
      %39 = vector.shape_cast %38 : vector<1x16x128xbf16> to vector<16x128xbf16>
      %40 = vector.shape_cast %36 : vector<16x128xbf16> to vector<1x16x128xbf16>
      tpu.vector_store %arg9[%37, %c0_22, %c0_23], %40 {strides = array<i32>} : memref<2x16x128xbf16, #tpu.memory_space<vmem>>, vector<1x16x128xbf16>,
    } else {
    }
    %c0_i32_1 = arith.constant 0 : i32
    %3 = arith.cmpi eq, %arg2, %c0_i32_1 : i32
    %4 = arith.extui %3 : i1 to i32
    %c0_i32_2 = arith.constant 0 : i32
    %5 = arith.cmpi ne, %4, %c0_i32_2 : i32
    scf.if %5 {
      %cst_11 = arith.constant 0.000000e+00 : f32
      %17 = vector.broadcast %cst_11 : f32 to vector<16x256xf32>
      %c0_12 = arith.constant 0 : index
      %c0_13 = arith.constant 0 : index
      %18 = vector.load %arg10[%c0_12, %c0_13] : memref<16x256xf32, #tpu.memory_space<vmem>>, vector<16x256xf32>
      tpu.vector_store %arg10[%c0_12, %c0_13], %17 {strides = array<i32>} : memref<16x256xf32, #tpu.memory_space<vmem>>, vector<16x256xf32>,
    } else {
    }
    %c0 = arith.constant 0 : index
    %c0_3 = arith.constant 0 : index
    %6 = vector.load %arg10[%c0, %c0_3] : memref<16x256xf32, #tpu.memory_space<vmem>>, vector<16x256xf32>
    %7 = arith.index_cast %arg2 : i32 to index
    %c0_4 = arith.constant 0 : index
    %c0_5 = arith.constant 0 : index
    %8 = vector.load %arg9[%7, %c0_4, %c0_5] : memref<2x16x128xbf16, #tpu.memory_space<vmem>>, vector<1x16x128xbf16>
    %9 = vector.shape_cast %8 : vector<1x16x128xbf16> to vector<16x128xbf16>
    %c0_6 = arith.constant 0 : index
    %c0_7 = arith.constant 0 : index
    %10 = vector.load %arg6[%c0_6, %c0_7] : memref<128x256xbf16, #tpu.memory_space<vmem>>, vector<128x256xbf16>
    %cst = arith.constant dense<0.000000e+00> : vector<16x256xf32>
    %11 = tpu.matmul %9, %10, %cst {dimension_numbers = #tpu.dot_dimension_numbers<[1], [0], [0], [1], [0, 0, 1, 1], [], []>} : vector<16x128xbf16>, vector<128x256xbf16>, vector<16x256xf32> -> vector<16x256xf32>
    %12 = arith.addf %6, %11 : vector<16x256xf32>
    %c0_8 = arith.constant 0 : index
    %c0_9 = arith.constant 0 : index
    %13 = vector.load %arg10[%c0_8, %c0_9] : memref<16x256xf32, #tpu.memory_space<vmem>>, vector<16x256xf32>
    tpu.vector_store %arg10[%c0_8, %c0_9], %12 {strides = array<i32>} : memref<16x256xf32, #tpu.memory_space<vmem>>, vector<16x256xf32>,
    %c1_i32 = arith.constant 1 : i32
    %14 = arith.cmpi eq, %arg2, %c1_i32 : i32
    %15 = arith.extui %14 : i1 to i32
    %c0_i32_10 = arith.constant 0 : i32
    %16 = arith.cmpi ne, %15, %c0_i32_10 : i32
    scf.if %16 {
      %c0_11 = arith.constant 0 : index
      %c0_12 = arith.constant 0 : index
      %17 = vector.load %arg10[%c0_11, %c0_12] : memref<16x256xf32, #tpu.memory_space<vmem>>, vector<16x256xf32>
      %c0_13 = arith.constant 0 : index
      %c0_14 = arith.constant 0 : index
      %18 = vector.load %arg7[%c0_13, %c0_14] : memref<1x256xf32, #tpu.memory_space<vmem>>, vector<1x256xf32>
      %19 = vector.broadcast %18 : vector<1x256xf32> to vector<16x256xf32>
      %20 = arith.addf %17, %19 : vector<16x256xf32>
      %21 = arith.truncf %20 : vector<16x256xf32> to vector<16x256xbf16>
      %c0_15 = arith.constant 0 : index
      %c0_16 = arith.constant 0 : index
      %22 = vector.load %arg8[%c0_15, %c0_16] : memref<16x256xbf16, #tpu.memory_space<vmem>>, vector<16x256xbf16>
      tpu.vector_store %arg8[%c0_15, %c0_16], %21 {strides = array<i32>} : memref<16x256xbf16, #tpu.memory_space<vmem>>, vector<16x256xbf16>,
    } else {
    }
    return
  }
  func.func @transform_0(%arg0: i32, %arg1: i32, %arg2: i32) -> (i32, i32) {
    %c0_i32 = arith.constant 0 : i32
    %c0_i32_0 = arith.constant 0 : i32
    return %arg0, %c0_i32 : i32, i32
  }
  func.func @transform_1(%arg0: i32, %arg1: i32, %arg2: i32) -> (i32, i32) {
    %c0_i32 = arith.constant 0 : i32
    %0 = arith.cmpi eq, %arg1, %c0_i32 : i32
    %c0_i32_0 = arith.constant 0 : i32
    %1 = arith.select %0, %arg2, %c0_i32_0 : i32
    %c0_i32_1 = arith.constant 0 : i32
    %c0_i32_2 = arith.constant 0 : i32
    return %c0_i32_1, %1 : i32, i32
  }
  func.func @transform_2(%arg0: i32, %arg1: i32, %arg2: i32) -> (i32, i32) {
    %c0_i32 = arith.constant 0 : i32
    %0 = arith.cmpi eq, %arg1, %c0_i32 : i32
    %c0_i32_0 = arith.constant 0 : i32
    %1 = arith.select %0, %arg2, %c0_i32_0 : i32
    %c0_i32_1 = arith.constant 0 : i32
    %c0_i32_2 = arith.constant 0 : i32
    return %c0_i32_1, %1 : i32, i32
  }
  func.func @transform_3(%arg0: i32, %arg1: i32, %arg2: i32) -> (i32, i32) {
    %c0_i32 = arith.constant 0 : i32
    return %arg2, %arg1 : i32, i32
  }
  func.func @transform_4(%arg0: i32, %arg1: i32, %arg2: i32) -> (i32, i32) {
    %c0_i32 = arith.constant 0 : i32
    %c0_i32_0 = arith.constant 0 : i32
    return %c0_i32, %arg1 : i32, i32
  }
  func.func @transform_5(%arg0: i32, %arg1: i32, %arg2: i32) -> (i32, i32) {
    %c0_i32 = arith.constant 0 : i32
    return %arg0, %arg1 : i32, i32
  }
}

</mosaic_0001>

<llo_original>
// kernel: tpu_custom_call.1
$region0: #{tpu_custom_call.1}
  #allocation0 [shape = 'u32[]', space=smem, size = 0x4, offset = 0x4, fixed_abs, tag = 'smem constant byte address 0x4 - core index']
  #allocation1 [shape = 'u32[72,128]{1,0:T(1,128)}', space=vmem, size = 0x9000, scoped, tag = 'internal scratch']
  #allocation2 [shape = 'bf16[2,16,128]{2,1,0:T(8,128)(2,1)}', space=vmem, size = 0x2000, scoped, tag = 'scratch operand']
  #allocation3 [shape = 'f32[16,256]{1,0:T(8,128)}', space=vmem, size = 0x4000, scoped, tag = 'scratch operand']
  %s0 = inlined_call_operand.hbm [shape: bf16[32,256], index: 0, kind: input, shape index: {}]
  %s1 = inlined_call_operand.hbm [shape: bf16[256,256], index: 1, kind: input, shape index: {}]
  %s2 = inlined_call_operand.hbm [shape: f32[1,256], index: 2, kind: input, shape index: {}]
  %s3 = inlined_call_operand.hbm [shape: bf16[256,1024], index: 3, kind: input, shape index: {}]
  %s4 = inlined_call_operand.hbm [shape: f32[1,1024], index: 4, kind: input, shape index: {}]
  %s5 = inlined_call_operand.hbm [shape: bf16[32,1024], index: 5, kind: output, shape index: {}]
  %s6 = sld [smem:[#allocation0]]
  $region85: #{tpu_custom_call.1} parent=0
    _
  %s8 = ssub.s32 1, %s6
  %s9 = scalar_select 0, %s8, %s6
  $region1: #{tpu_custom_call.1} parent=0
    #allocation4 [shape = 'u8[16384]{0}', space=vmem, size = 0x4000, scoped, tag = 'input window, operand 0']
    #allocation5 [shape = 's32[2]{0}', space=sflag, size = 0x8, scoped, tag = 'scoped memory for tpu_custom_call.1']
    #allocation6 [shape = 's32[2]{0}', space=sflag, size = 0x8, scoped, tag = 'scoped memory for tpu_custom_call.1']
    #allocation7 [shape = 'u8[131072]{0}', space=vmem, size = 0x20000, scoped, tag = 'input window, operand 1']
    #allocation8 [shape = 's32[2]{0}', space=sflag, size = 0x8, scoped, tag = 'scoped memory for tpu_custom_call.1']
    #allocation9 [shape = 'u8[1024]{0}', space=vmem, size = 0x400, scoped, tag = 'input window, operand 2']
    #allocation10 [shape = 'u8[131072]{0}', space=vmem, size = 0x20000, scoped, tag = 'input window, operand 3']
    #allocation11 [shape = 's32[2]{0}', space=sflag, size = 0x8, scoped, tag = 'scoped memory for tpu_custom_call.1']
    #allocation12 [shape = 'u8[2048]{0}', space=vmem, size = 0x800, scoped, tag = 'input window, operand 4']
    #allocation13 [shape = 'u8[16384]{0}', space=vmem, size = 0x4000, scoped, tag = 'output window, operand 0']
    %10 = vsyncpa [#allocation5], 0
    %s11 = scalar_lea.sflag [#allocation5], 1
    %12 = vsyncpa %s11, 0
    %13 = vsyncpa [#allocation8], 0
    %s14 = scalar_lea.sflag [#allocation8], 1
    %15 = vsyncpa %s14, 0
    %16 = vsyncpa [#allocation11], 0
    %s17 = scalar_lea.sflag [#allocation11], 1
    %18 = vsyncpa %s17, 0
    %19 = vsyncpa [#allocation6], 0
    %s20 = scalar_lea.sflag [#allocation6], 1
    %21 = vsyncpa %s20, 0
    loop: start=0, step=1, limit=18
    $region2: #{tpu_custom_call.1} parent=1 // loop_pre_header
      _
    $region3: #{tpu_custom_call.1} parent=1 // loop_header
      %s23 = sphi 0, %s27
      %p24 = scmp.ge.s32.totalorder %s23, 18
      %s30 = sphi 0, %s49
      %s31 = sphi 0, %s45
      %s32 = sphi 0, %s41
      %s33 = sphi 0, %s30
      %s34 = sphi 0, %s31
      %s35 = sphi 0, %s32
      %s36 = sphi 0, %s33
      %s37 = sphi 0, %s34
      %s38 = sphi 0, %s35
      %s52 = sphi 0, %s54
      %s55 = sphi 0, %s52
      %s56 = sphi 0, %s55
      %s72 = sphi 0, %s56
      %s82 = sphi 0, %s84
      %s85 = sphi 0, %s82
      %s86 = sphi 0, %s85
      %s102 = sphi 0, %s86
      %s112 = sphi 0, %s114
      %s115 = sphi 0, %s112
      %s116 = sphi 0, %s115
      %s132 = sphi 0, %s116
      %s140 = sphi 0, %s142
      %s143 = sphi 0, %s140
      %s144 = sphi 0, %s143
      %s160 = sphi 0, %s144
      %s166 = sphi 0, %s168
      %s169 = sphi 0, %s166
      %s170 = sphi 0, %s169
      %s186 = sphi 0, %s170
      %s194 = sphi 0, %s196
      %s197 = sphi 0, %s194
      %s198 = sphi 0, %s197
      %s214 = sphi 0, %s198
    $region4: #{tpu_custom_call.1} parent=1 // loop_header_branch
      %26 = sbr.rel (%p24) target = $region8
    $region5: #{tpu_custom_call.1} parent=1 // loop_body
      %s28 = ssub.s32 %s23, 1
      %s29 = ssub.s32 %s23, 2
      %s39 = sadd.s32 1, %s32
      %p40 = scmp.ge.s32.totalorder %s39, 2
      %s41 = scalar_select %p40, 0, %s39
      %s42 = sadd.s32 1, %s31
      %s43 = scalar_select %p40, %s42, %s31
      %p44 = scmp.ge.s32.totalorder %s43, 4
      %s45 = scalar_select %p44, 0, %s43
      %s46 = sadd.s32 1, %s30
      %s47 = scalar_select %p44, %s46, %s30
      %p48 = scmp.ge.s32.totalorder %s47, 2
      %s49 = scalar_select %p48, 0, %s47
      %s50 = ssub.s32 %s30, %s49
      %p51 = scmp.eq.s32.totalorder %s50, 0
      %s53 = sadd.s32 %s52, 1
      %s54 = scalar_select %p51, %s52, %s53
      %p57 = pneg %p51
      %p58 = scmp.eq.s32.totalorder %s23, 15
      %p59 = por %p57, %p58
      %p60 = scmp.ne.s32.totalorder %s52, %s55
      %p61 = scmp.eq.s32.totalorder %s23, 0
      %p62 = por %p60, %p61
      %p63 = scmp.ne.s32.totalorder %s52, %s55
      %p64 = scmp.eq.s32.totalorder %s28, 15
      %p65 = por %p63, %p64
      %p66 = scmp.ne.s32.totalorder %s55, %s56
      %p67 = scmp.eq.s32.totalorder %s28, 0
      %p68 = por %p66, %p67
      %p69 = scmp.ne.s32.totalorder %s55, %s56
      %p70 = scmp.eq.s32.totalorder %s29, 15
      %p71 = por %p69, %p70
      %p73 = scmp.ne.s32.totalorder %s56, %s72
      %p74 = scmp.eq.s32.totalorder %s29, 0
      %p75 = por %p73, %p74
      %p76 = scmp.eq.s32.totalorder %s31, 0
      %s77 = scalar_select %p76, %s32, 0
      %p78 = scmp.eq.s32.totalorder %s45, 0
      %s79 = scalar_select %p78, %s41, 0
      %s80 = ssub.s32 %s77, %s79
      %p81 = scmp.eq.s32.totalorder %s80, 0
      %s83 = sadd.s32 %s82, 1
      %s84 = scalar_select %p81, %s82, %s83
      %p87 = pneg %p81
      %p88 = scmp.eq.s32.totalorder %s23, 15
      %p89 = por %p87, %p88
      %p90 = scmp.ne.s32.totalorder %s82, %s85
      %p91 = scmp.eq.s32.totalorder %s23, 0
      %p92 = por %p90, %p91
      %p93 = scmp.ne.s32.totalorder %s82, %s85
      %p94 = scmp.eq.s32.totalorder %s28, 15
      %p95 = por %p93, %p94
      %p96 = scmp.ne.s32.totalorder %s85, %s86
      %p97 = scmp.eq.s32.totalorder %s28, 0
      %p98 = por %p96, %p97
      %p99 = scmp.ne.s32.totalorder %s85, %s86
      %p100 = scmp.eq.s32.totalorder %s29, 15
      %p101 = por %p99, %p100
      %p103 = scmp.ne.s32.totalorder %s86, %s102
      %p104 = scmp.eq.s32.totalorder %s29, 0
      %p105 = por %p103, %p104
      %p106 = scmp.eq.s32.totalorder %s31, 0
      %s107 = scalar_select %p106, %s32, 0
      %p108 = scmp.eq.s32.totalorder %s45, 0
      %s109 = scalar_select %p108, %s41, 0
      %s110 = ssub.s32 %s107, %s109
      %p111 = scmp.eq.s32.totalorder %s110, 0
      %s113 = sadd.s32 %s112, 1
      %s114 = scalar_select %p111, %s112, %s113
      %p117 = pneg %p111
      %p118 = scmp.eq.s32.totalorder %s23, 15
      %p119 = por %p117, %p118
      %p120 = scmp.ne.s32.totalorder %s112, %s115
      %p121 = scmp.eq.s32.totalorder %s23, 0
      %p122 = por %p120, %p121
      %p123 = scmp.ne.s32.totalorder %s112, %s115
      %p124 = scmp.eq.s32.totalorder %s28, 15
      %p125 = por %p123, %p124
      %p126 = scmp.ne.s32.totalorder %s115, %s116
      %p127 = scmp.eq.s32.totalorder %s28, 0
      %p128 = por %p126, %p127
      %p129 = scmp.ne.s32.totalorder %s115, %s116
      %p130 = scmp.eq.s32.totalorder %s29, 15
      %p131 = por %p129, %p130
      %p133 = scmp.ne.s32.totalorder %s116, %s132
      %p134 = scmp.eq.s32.totalorder %s29, 0
      %p135 = por %p133, %p134
      %s136 = ssub.s32 %s32, %s41
      %s137 = ssub.s32 %s31, %s45
      %s138 = sor.u32 %s136, %s137
      %p139 = scmp.eq.s32.totalorder %s138, 0
      %s141 = sadd.s32 %s140, 1
      %s142 = scalar_select %p139, %s140, %s141
      %p145 = pneg %p139
      %p146 = scmp.eq.s32.totalorder %s23, 15
      %p147 = por %p145, %p146
      %p148 = scmp.ne.s32.totalorder %s140, %s143
      %p149 = scmp.eq.s32.totalorder %s23, 0
      %p150 = por %p148, %p149
      %p151 = scmp.ne.s32.totalorder %s140, %s143
      %p152 = scmp.eq.s32.totalorder %s28, 15
      %p153 = por %p151, %p152
      %p154 = scmp.ne.s32.totalorder %s143, %s144
      %p155 = scmp.eq.s32.totalorder %s28, 0
      %p156 = por %p154, %p155
      %p157 = scmp.ne.s32.totalorder %s143, %s144
      %p158 = scmp.eq.s32.totalorder %s29, 15
      %p159 = por %p157, %p158
      %p161 = scmp.ne.s32.totalorder %s144, %s160
      %p162 = scmp.eq.s32.totalorder %s29, 0
      %p163 = por %p161, %p162
      %s164 = ssub.s32 %s31, %s45
      %p165 = scmp.eq.s32.totalorder %s164, 0
      %s167 = sadd.s32 %s166, 1
      %s168 = scalar_select %p165, %s166, %s167
      %p171 = pneg %p165
      %p172 = scmp.eq.s32.totalorder %s23, 15
      %p173 = por %p171, %p172
      %p174 = scmp.ne.s32.totalorder %s166, %s169
      %p175 = scmp.eq.s32.totalorder %s23, 0
      %p176 = por %p174, %p175
      %p177 = scmp.ne.s32.totalorder %s166, %s169
      %p178 = scmp.eq.s32.totalorder %s28, 15
      %p179 = por %p177, %p178
      %p180 = scmp.ne.s32.totalorder %s169, %s170
      %p181 = scmp.eq.s32.totalorder %s28, 0
      %p182 = por %p180, %p181
      %p183 = scmp.ne.s32.totalorder %s169, %s170
      %p184 = scmp.eq.s32.totalorder %s29, 15
      %p185 = por %p183, %p184
      %p187 = scmp.ne.s32.totalorder %s170, %s186
      %p188 = scmp.eq.s32.totalorder %s29, 0
      %p189 = por %p187, %p188
      %s190 = ssub.s32 %s30, %s49
      %s191 = ssub.s32 %s31, %s45
      %s192 = sor.u32 %s190, %s191
      %p193 = scmp.eq.s32.totalorder %s192, 0
      %s195 = sadd.s32 %s194, 1
      %s196 = scalar_select %p193, %s194, %s195
      %p199 = pneg %p193
      %p200 = scmp.eq.s32.totalorder %s23, 15
      %p201 = por %p199, %p200
      %p202 = scmp.ne.s32.totalorder %s194, %s197
      %p203 = scmp.eq.s32.totalorder %s23, 0
      %p204 = por %p202, %p203
      %p205 = scmp.ne.s32.totalorder %s194, %s197
      %p206 = scmp.eq.s32.totalorder %s28, 15
      %p207 = por %p205, %p206
      %p208 = scmp.ne.s32.totalorder %s197, %s198
      %p209 = scmp.eq.s32.totalorder %s28, 0
      %p210 = por %p208, %p209
      %p211 = scmp.ne.s32.totalorder %s197, %s198
      %p212 = scmp.eq.s32.totalorder %s29, 15
      %p213 = por %p211, %p212
      %p215 = scmp.ne.s32.totalorder %s198, %s214
      %p216 = scmp.eq.s32.totalorder %s29, 0
      %p217 = por %p215, %p216
      %p218 = scmp.le.s32.totalorder 1, %s23
      %p219 = scmp.lt.s32.totalorder %s23, 17
      %p220 = pnand %p218, %p219
      %p221 = pneg %p220
      // Predicated region
      $region9: #{tpu_custom_call.1} parent=5 // pred_check
        _
      $region10: #{tpu_custom_call.1} parent=5 // pred_check_branch
        %223 = sbr.rel (%p220) target = $region12
      $region11: #{tpu_custom_call.1} parent=5 // pred_region
        %s224 = ssub.s32 %s23, 1
      $region12: #{tpu_custom_call.1} parent=5 // pred_fallthru
        _
      %p225 = scmp.lt.s32.totalorder %s23, 16
      // Predicated region
      $region13: #{tpu_custom_call.1} parent=5 // pred_check
        %p226 = pneg %p225
      $region14: #{tpu_custom_call.1} parent=5 // pred_check_branch
        %228 = sbr.rel (%p226) target = $region16
      $region15: #{tpu_custom_call.1} parent=5 // pred_region
        // Predicated region
        $region17: #{tpu_custom_call.1} parent=15 // pred_check
          %p229 = pneg %p62
        $region18: #{tpu_custom_call.1} parent=15 // pred_check_branch
          %231 = sbr.rel (%p229) target = $region20
        $region19: #{tpu_custom_call.1} parent=15 // pred_region
          %s232 = sand.u32 %s52, 1
          %s233 = scalar_lea.sflag [#allocation5], %s232
          %s234 = sand.u32 %s52, 1
          %s235 = smul.addr %s234, 16
          %s236 = scalar_lea.vmem [#allocation4], %s235
          %s237 = smul.u32 2, %s30
          %239 = vsyncadd %s233, 0
          %s240 = smul.addr %s237, 2
          %s241 = smul.addr %s240, 4
          %s242 = scalar_lea.hbm %s0, %s241
          %s243 = sshll.u32 %s242, 4
          %s244 = int_to_ptr.hbm [resolvable:$true] %s243
          %s245 = sshll.u32 %s236, 4
          %s246 = int_to_ptr.vmem [resolvable:$true] %s245
          %251 = dma.hbm_to_vmem [thread:$0]  %s244, 256, %s246, %s233, 128, 128, 8
        $region20: #{tpu_custom_call.1} parent=15 // pred_fallthru
          _
        // Predicated region
        $region21: #{tpu_custom_call.1} parent=15 // pred_check
          %p252 = pneg %p92
        $region22: #{tpu_custom_call.1} parent=15 // pred_check_branch
          %254 = sbr.rel (%p252) target = $region24
        $region23: #{tpu_custom_call.1} parent=15 // pred_region
          %s255 = sand.u32 %s23, 1
          %s256 = scalar_lea.sflag [#allocation8], %s255
          %s257 = sand.u32 %s82, 1
          %s258 = smul.addr %s257, 128
          %s259 = scalar_lea.vmem [#allocation7], %s258
          %p260 = scmp.eq.s32.totalorder %s31, 0
          %s261 = scalar_select %p260, %s32, 0
          %263 = vsyncadd %s256, 0
          %s264 = smul.addr %s261, 4
          %s265 = scalar_lea.hbm %s1, %s264
          %s266 = sshll.u32 %s265, 4
          %s267 = int_to_ptr.hbm [resolvable:$true] %s266
          %s268 = sshll.u32 %s259, 4
          %s269 = int_to_ptr.vmem [resolvable:$true] %s268
          %274 = dma.hbm_to_vmem [thread:$0]  %s267, 2048, %s269, %s256, 128, 64, 4
        $region24: #{tpu_custom_call.1} parent=15 // pred_fallthru
          _
        // Predicated region
        $region25: #{tpu_custom_call.1} parent=15 // pred_check
          %p275 = pneg %p122
        $region26: #{tpu_custom_call.1} parent=15 // pred_check_branch
          %277 = sbr.rel (%p275) target = $region28
        $region27: #{tpu_custom_call.1} parent=15 // pred_region
          %s278 = sand.u32 %s23, 1
          %s279 = scalar_lea.sflag [#allocation8], %s278
          %s280 = sand.u32 %s112, 1
          %s281 = scalar_lea.vmem [#allocation9], %s280
          %p282 = scmp.eq.s32.totalorder %s31, 0
          %s283 = scalar_select %p282, %s32, 0
          %285 = vsyncadd %s279, 0
          %s286 = scalar_lea.hbm %s2, %s283
          %s288 = sshll.u32 %s286, 4
          %s289 = int_to_ptr.hbm [resolvable:$true] %s288
          %s290 = sshll.u32 %s281, 4
          %s291 = int_to_ptr.vmem [resolvable:$true] %s290
          %293 = dma.hbm_to_vmem [thread:$0]  %s289, 16, %s291, %s279
        $region28: #{tpu_custom_call.1} parent=15 // pred_fallthru
          _
        // Predicated region
        $region29: #{tpu_custom_call.1} parent=15 // pred_check
          %p294 = pneg %p150
        $region30: #{tpu_custom_call.1} parent=15 // pred_check_branch
          %296 = sbr.rel (%p294) target = $region32
        $region31: #{tpu_custom_call.1} parent=15 // pred_region
          %s297 = sand.u32 %s23, 1
          %s298 = scalar_lea.sflag [#allocation11], %s297
          %s299 = sand.u32 %s140, 1
          %s300 = smul.addr %s299, 128
          %s301 = scalar_lea.vmem [#allocation10], %s300
          %s302 = smul.u32 16, %s32
          %s303 = smul.u32 2, %s31
          %305 = vsyncadd %s298, 0
          %s306 = smul.addr %s302, 8
          %s307 = sadd.s32 %s303, %s306
          %s308 = smul.addr %s307, 4
          %s309 = scalar_lea.hbm %s3, %s308
          %s310 = sshll.u32 %s309, 4
          %s311 = int_to_ptr.hbm [resolvable:$true] %s310
          %s312 = sshll.u32 %s301, 4
          %s313 = int_to_ptr.vmem [resolvable:$true] %s312
          %318 = dma.hbm_to_vmem [thread:$0]  %s311, 2048, %s313, %s298, 512, 128, 8
        $region32: #{tpu_custom_call.1} parent=15 // pred_fallthru
          _
        // Predicated region
        $region33: #{tpu_custom_call.1} parent=15 // pred_check
          %p319 = pneg %p176
        $region34: #{tpu_custom_call.1} parent=15 // pred_check_branch
          %321 = sbr.rel (%p319) target = $region36
        $region35: #{tpu_custom_call.1} parent=15 // pred_region
          %s322 = sand.u32 %s23, 1
          %s323 = scalar_lea.sflag [#allocation11], %s322
          %s324 = sand.u32 %s166, 1
          %s325 = smul.addr %s324, 2
          %s326 = scalar_lea.vmem [#allocation12], %s325
          %s327 = smul.u32 2, %s31
          %329 = vsyncadd %s323, 0
          %s330 = scalar_lea.hbm %s4, %s327
          %s332 = sshll.u32 %s330, 4
          %s333 = int_to_ptr.hbm [resolvable:$true] %s332
          %s334 = sshll.u32 %s326, 4
          %s335 = int_to_ptr.vmem [resolvable:$true] %s334
          %337 = dma.hbm_to_vmem [thread:$0]  %s333, 32, %s335, %s323
        $region36: #{tpu_custom_call.1} parent=15 // pred_fallthru
          _
      $region16: #{tpu_custom_call.1} parent=5 // pred_fallthru
        _
      %p338 = scmp.le.s32.totalorder 1, %s23
      %p339 = scmp.lt.s32.totalorder %s23, 17
      %p340 = pnand %p338, %p339
      %p341 = pneg %p340
      // Predicated region
      $region37: #{tpu_custom_call.1} parent=5 // pred_check
        _
      $region38: #{tpu_custom_call.1} parent=5 // pred_check_branch
        %343 = sbr.rel (%p340) target = $region40
      $region39: #{tpu_custom_call.1} parent=5 // pred_region
        %s344 = ssub.s32 %s23, 1
        %s345 = sand.u32 %s55, 1
        %s346 = scalar_lea.sflag [#allocation5], %s345
        %s347 = sand.u32 %s55, 1
        %s348 = smul.addr %s347, 16
        %s349 = scalar_lea.vmem [#allocation4], %s348
        // Predicated region
        $region41: #{tpu_custom_call.1} parent=39 // pred_check
          %p350 = pneg %p68
        $region42: #{tpu_custom_call.1} parent=39 // pred_check_branch
          %352 = sbr.rel (%p350) target = $region44
        $region43: #{tpu_custom_call.1} parent=39 // pred_region
          %354 = dma.done %s346, 256
        $region44: #{tpu_custom_call.1} parent=39 // pred_fallthru
          _
        %s355 = sand.u32 %s28, 1
        %s356 = scalar_lea.sflag [#allocation8], %s355
        %s357 = sand.u32 %s85, 1
        %s358 = smul.addr %s357, 128
        %s359 = scalar_lea.vmem [#allocation7], %s358
        // Predicated region
        $region45: #{tpu_custom_call.1} parent=39 // pred_check
          %p360 = pneg %p98
        $region46: #{tpu_custom_call.1} parent=39 // pred_check_branch
          %362 = sbr.rel (%p360) target = $region48
        $region47: #{tpu_custom_call.1} parent=39 // pred_region
          %364 = dma.done %s356, 2048
        $region48: #{tpu_custom_call.1} parent=39 // pred_fallthru
          _
        %s365 = sand.u32 %s28, 1
        %s366 = scalar_lea.sflag [#allocation8], %s365
        %s367 = sand.u32 %s115, 1
        %s368 = scalar_lea.vmem [#allocation9], %s367
        // Predicated region
        $region49: #{tpu_custom_call.1} parent=39 // pred_check
          %p369 = pneg %p128
        $region50: #{tpu_custom_call.1} parent=39 // pred_check_branch
          %371 = sbr.rel (%p369) target = $region52
        $region51: #{tpu_custom_call.1} parent=39 // pred_region
          %373 = dma.done %s366, 16
        $region52: #{tpu_custom_call.1} parent=39 // pred_fallthru
          _
        %s374 = sand.u32 %s28, 1
        %s375 = scalar_lea.sflag [#allocation11], %s374
        %s376 = sand.u32 %s143, 1
        %s377 = smul.addr %s376, 128
        %s378 = scalar_lea.vmem [#allocation10], %s377
        // Predicated region
        $region53: #{tpu_custom_call.1} parent=39 // pred_check
          %p379 = pneg %p156
        $region54: #{tpu_custom_call.1} parent=39 // pred_check_branch
          %381 = sbr.rel (%p379) target = $region56
        $region55: #{tpu_custom_call.1} parent=39 // pred_region
          %383 = dma.done %s375, 2048
        $region56: #{tpu_custom_call.1} parent=39 // pred_fallthru
          _
        %s384 = sand.u32 %s28, 1
        %s385 = scalar_lea.sflag [#allocation11], %s384
        %s386 = sand.u32 %s169, 1
        %s387 = smul.addr %s386, 2
        %s388 = scalar_lea.vmem [#allocation12], %s387
        // Predicated region
        $region57: #{tpu_custom_call.1} parent=39 // pred_check
          %p389 = pneg %p182
        $region58: #{tpu_custom_call.1} parent=39 // pred_check_branch
          %391 = sbr.rel (%p389) target = $region60
        $region59: #{tpu_custom_call.1} parent=39 // pred_region
          %393 = dma.done %s385, 32
        $region60: #{tpu_custom_call.1} parent=39 // pred_fallthru
          _
        %s394 = sand.u32 %s55, 1
        %s395 = scalar_lea.sflag [#allocation5], %s394
        %s396 = sand.u32 %s55, 1
        %s397 = smul.addr %s396, 16
        %s398 = scalar_lea.vmem [#allocation4], %s397
        %p399 = pneg %p68
        %p400 = pneg %p65
        %s401 = sand.u32 %s28, 1
        %s402 = scalar_lea.sflag [#allocation8], %s401
        %s403 = sand.u32 %s85, 1
        %s404 = smul.addr %s403, 128
        %s405 = scalar_lea.vmem [#allocation7], %s404
        %p406 = pneg %p98
        %p407 = pneg %p95
        %s408 = sand.u32 %s28, 1
        %s409 = scalar_lea.sflag [#allocation8], %s408
        %s410 = sand.u32 %s115, 1
        %s411 = scalar_lea.vmem [#allocation9], %s410
        %p412 = pneg %p128
        %p413 = pneg %p125
        %s414 = sand.u32 %s28, 1
        %s415 = scalar_lea.sflag [#allocation11], %s414
        %s416 = sand.u32 %s143, 1
        %s417 = smul.addr %s416, 128
        %s418 = scalar_lea.vmem [#allocation10], %s417
        %p419 = pneg %p156
        %p420 = pneg %p153
        %s421 = sand.u32 %s28, 1
        %s422 = scalar_lea.sflag [#allocation11], %s421
        %s423 = sand.u32 %s169, 1
        %s424 = smul.addr %s423, 2
        %s425 = scalar_lea.vmem [#allocation12], %s424
        %p426 = pneg %p182
        %p427 = pneg %p179
        %p428 = pneg %p210
        %p429 = pneg %p207
        %s430 = sand.u32 %s197, 1
        %s431 = scalar_lea.sflag [#allocation6], %s430
        %s432 = sand.u32 %s197, 1
        %s433 = smul.addr %s432, 16
        %s434 = scalar_lea.vmem [#allocation13], %s433
        %s435 = smul.u32 2, %s33
        %p436 = scmp.eq.s32.totalorder %s34, 0
        %s437 = scalar_select %p436, %s35, 0
        %p438 = scmp.eq.s32.totalorder %s34, 0
        %s439 = scalar_select %p438, %s35, 0
        %s440 = smul.u32 16, %s35
        %s441 = smul.u32 2, %s34
        %s442 = smul.u32 2, %s34
        %s443 = smul.u32 2, %s33
        %s444 = smul.u32 2, %s34
        %p445 = scmp.eq.s32.totalorder %s34, 0
        // Predicated region
        $region61: #{tpu_custom_call.1} parent=39 // pred_check
          %p446 = pneg %p445
        $region62: #{tpu_custom_call.1} parent=39 // pred_check_branch
          %448 = sbr.rel (%p446) target = $region64
        $region63: #{tpu_custom_call.1} parent=39 // pred_region
          %v449 = vld [vmem:[%s349] sm:$0xff]
          %v450 = vld [vmem:[%s349 + $0x8] sm:$0xff]
          %v451 = vld [vmem:[%s359] sm:$0xf]
          %v452 = vld [vmem:[%s359 + $0x4] sm:$0xf]
          %v453 = vld [vmem:[%s359 + $0x8] sm:$0xf]
          %v454 = vld [vmem:[%s359 + $0xc] sm:$0xf]
          %v455 = vld [vmem:[%s359 + $0x10] sm:$0xf]
          %v456 = vld [vmem:[%s359 + $0x14] sm:$0xf]
          %v457 = vld [vmem:[%s359 + $0x18] sm:$0xf]
          %v458 = vld [vmem:[%s359 + $0x1c] sm:$0xf]
          %v459 = vld [vmem:[%s359 + $0x20] sm:$0xf]
          %v460 = vld [vmem:[%s359 + $0x24] sm:$0xf]
          %v461 = vld [vmem:[%s359 + $0x28] sm:$0xf]
          %v462 = vld [vmem:[%s359 + $0x2c] sm:$0xf]
          %v463 = vld [vmem:[%s359 + $0x30] sm:$0xf]
          %v464 = vld [vmem:[%s359 + $0x34] sm:$0xf]
          %v465 = vld [vmem:[%s359 + $0x38] sm:$0xf]
          %v466 = vld [vmem:[%s359 + $0x3c] sm:$0xf]
          %v467 = vld [vmem:[%s359 + $0x40] sm:$0xf]
          %v468 = vld [vmem:[%s359 + $0x44] sm:$0xf]
          %v469 = vld [vmem:[%s359 + $0x48] sm:$0xf]
          %v470 = vld [vmem:[%s359 + $0x4c] sm:$0xf]
          %v471 = vld [vmem:[%s359 + $0x50] sm:$0xf]
          %v472 = vld [vmem:[%s359 + $0x54] sm:$0xf]
          %v473 = vld [vmem:[%s359 + $0x58] sm:$0xf]
          %v474 = vld [vmem:[%s359 + $0x5c] sm:$0xf]
          %v475 = vld [vmem:[%s359 + $0x60] sm:$0xf]
          %v476 = vld [vmem:[%s359 + $0x64] sm:$0xf]
          %v477 = vld [vmem:[%s359 + $0x68] sm:$0xf]
          %v478 = vld [vmem:[%s359 + $0x6c] sm:$0xf]
          %v479 = vld [vmem:[%s359 + $0x70] sm:$0xf]
          %v480 = vld [vmem:[%s359 + $0x74] sm:$0xf]
          %v481 = vld [vmem:[%s359 + $0x78] sm:$0xf]
          %v482 = vld [vmem:[%s359 + $0x7c] sm:$0xf]
          %v483 = vld [vmem:[%s368] sm:$0x1]
          %v485 = vperm.slane %v483, 0
          %v489 = vunpack.c.l.b16 %v449
          %v490 = vunpack.c.h.b16 %v449
          %v491 = vunpack.c.l.b16 %v450
          %v492 = vunpack.c.h.b16 %v450
          %v493 = vpack.c.b16 %v491, %v489
          %v494 = vpack.c.b16 %v492, %v490
          %v529 = vunpack.c.l.b16 %v451
          %v530 = vunpack.c.l.b16 %v452
          %v531 = vunpack.c.l.b16 %v453
          %v532 = vunpack.c.l.b16 %v454
          %v533 = vunpack.c.l.b16 %v455
          %v534 = vunpack.c.l.b16 %v456
          %v535 = vunpack.c.l.b16 %v457
          %v536 = vunpack.c.l.b16 %v458
          %v537 = vunpack.c.l.b16 %v459
          %v538 = vunpack.c.l.b16 %v460
          %v539 = vunpack.c.l.b16 %v461
          %v540 = vunpack.c.l.b16 %v462
          %v541 = vunpack.c.l.b16 %v463
          %v542 = vunpack.c.l.b16 %v464
          %v543 = vunpack.c.l.b16 %v465
          %v544 = vunpack.c.l.b16 %v466
          %v545 = vunpack.c.l.b16 %v467
          %v546 = vunpack.c.l.b16 %v468
          %v547 = vunpack.c.l.b16 %v469
          %v548 = vunpack.c.l.b16 %v470
          %v549 = vunpack.c.l.b16 %v471
          %v550 = vunpack.c.l.b16 %v472
          %v551 = vunpack.c.l.b16 %v473
          %v552 = vunpack.c.l.b16 %v474
          %v553 = vunpack.c.l.b16 %v475
          %v554 = vunpack.c.l.b16 %v476
          %v555 = vunpack.c.l.b16 %v477
          %v556 = vunpack.c.l.b16 %v478
          %v557 = vunpack.c.l.b16 %v479
          %v558 = vunpack.c.l.b16 %v480
          %v559 = vunpack.c.l.b16 %v481
          %v560 = vunpack.c.l.b16 %v482
          %v561 = vpack.c.b16 %v530, %v529
          %v562 = vpack.c.b16 %v532, %v531
          %v563 = vpack.c.b16 %v534, %v533
          %v564 = vpack.c.b16 %v536, %v535
          %v565 = vpack.c.b16 %v538, %v537
          %v566 = vpack.c.b16 %v540, %v539
          %v567 = vpack.c.b16 %v542, %v541
          %v568 = vpack.c.b16 %v544, %v543
          %v569 = vpack.c.b16 %v546, %v545
          %v570 = vpack.c.b16 %v548, %v547
          %v571 = vpack.c.b16 %v550, %v549
          %v572 = vpack.c.b16 %v552, %v551
          %v573 = vpack.c.b16 %v554, %v553
          %v574 = vpack.c.b16 %v556, %v555
          %v575 = vpack.c.b16 %v558, %v557
          %v576 = vpack.c.b16 %v560, %v559
          %593 = vmatpush.bf16.msra.mxu0 %v568
          %594 = vmatpush.bf16.msra.mxu0 %v567
          %595 = vmatpush.bf16.msra.mxu0 %v566
          %596 = vmatpush.bf16.msra.mxu0 %v565
          %597 = vmatpush.bf16.msra.mxu0 %v564
          %598 = vmatpush.bf16.msra.mxu0 %v563
          %599 = vmatpush.bf16.msra.mxu0 %v562
          %600 = vmatpush.bf16.msra.mxu0 %v561
          %601 = vmatmul.bf16.gmra.mxu0 %v493
          %v602 = vpop.f32.mrf.mxu0
          %v603 = vadd.f32 %v485, %v602
          %v604 = vpop.f32.mrf.mxu0
          %v605 = vadd.f32 %v485, %v604
          %606 = vdwg.mxu0
          %607 = vmatpush.bf16.msra.mxu0 %v576
          %608 = vmatpush.bf16.msra.mxu0 %v575
          %609 = vmatpush.bf16.msra.mxu0 %v574
          %610 = vmatpush.bf16.msra.mxu0 %v573
          %611 = vmatpush.bf16.msra.mxu0 %v572
          %612 = vmatpush.bf16.msra.mxu0 %v571
          %613 = vmatpush.bf16.msra.mxu0 %v570
          %614 = vmatpush.bf16.msra.mxu0 %v569
          %615 = vmatmul.bf16.gmra.mxu0 %v494
          %v616 = vpop.f32.mrf.mxu0
          %v617 = vadd.f32 %v603, %v616
          %v618 = vpop.f32.mrf.mxu0
          %v619 = vadd.f32 %v605, %v618
          %620 = vdwg.mxu0
          %v621 = vmul.f32 %v617, %v617
          %v622 = vmul.f32 %v619, %v619
          %v623 = vmul.f32 %v617, %v621
          %v624 = vmul.f32 %v619, %v622
          %v625 = vmul.f32 %v623, 0.044715
          %v626 = vmul.f32 %v624, 0.044715
          %v627 = vadd.f32 %v617, %v625
          %v628 = vadd.f32 %v619, %v626
          %v629 = vmul.f32 %v627, 0.7978846
          %v630 = vmul.f32 %v628, 0.7978846
          %v631 = vtanh.pop %v629
          %v632 = vtanh.pop %v630
          %v633 = vadd.f32 %v631, 1.0
          %v634 = vadd.f32 %v632, 1.0
          %v635 = vmul.f32 %v633, 0.5
          %v636 = vmul.f32 %v634, 0.5
          %v637 = vmul.f32 %v617, %v635
          %v638 = vmul.f32 %v619, %v636
          %v639 = vpack.c.bf16 %v637, %v637
          %v640 = vpack.c.bf16 %v638, %v638
          %s641 = smul.u32 %s35, 2
          %s642 = smul.addr %s641, 4
          %s643 = scalar_lea.vmem [#allocation2], %s642
          %644 = vst [vmem:[%s643] sm:$0xf] %v639
          %645 = vst [vmem:[%s643 + $0x4] sm:$0xf] %v640
        $region64: #{tpu_custom_call.1} parent=39 // pred_fallthru
          _
        %p646 = scmp.eq.s32.totalorder %s35, 0
        // Predicated region
        $region65: #{tpu_custom_call.1} parent=39 // pred_check
          %p647 = pneg %p646
        $region66: #{tpu_custom_call.1} parent=39 // pred_check_branch
          %649 = sbr.rel (%p647) target = $region68
        $region67: #{tpu_custom_call.1} parent=39 // pred_region
          %650 = vst [vmem:[#allocation3] sm:$0xff] 0.0
          %651 = vst [vmem:[#allocation3 + $0x8] sm:$0xff] 0.0
          %652 = vst [vmem:[#allocation3 + $0x10] sm:$0xff] 0.0
          %653 = vst [vmem:[#allocation3 + $0x18] sm:$0xff] 0.0
        $region68: #{tpu_custom_call.1} parent=39 // pred_fallthru
          _
        %v654 = vld [vmem:[#allocation3] sm:$0xff]
        %v655 = vld [vmem:[#allocation3 + $0x8] sm:$0xff]
        %v656 = vld [vmem:[#allocation3 + $0x10] sm:$0xff]
        %v657 = vld [vmem:[#allocation3 + $0x18] sm:$0xff]
        %s658 = smul.u32 %s35, 2
        %s659 = smul.addr %s658, 4
        %s660 = scalar_lea.vmem [#allocation2], %s659
        %v661 = vld [vmem:[%s660] sm:$0xf]
        %v662 = vld [vmem:[%s660 + $0x4] sm:$0xf]
        %v663 = vld [vmem:[%s378] sm:$0xff]
        %v664 = vld [vmem:[%s378 + $0x8] sm:$0xff]
        %v665 = vld [vmem:[%s378 + $0x10] sm:$0xff]
        %v666 = vld [vmem:[%s378 + $0x18] sm:$0xff]
        %v667 = vld [vmem:[%s378 + $0x20] sm:$0xff]
        %v668 = vld [vmem:[%s378 + $0x28] sm:$0xff]
        %v669 = vld [vmem:[%s378 + $0x30] sm:$0xff]
        %v670 = vld [vmem:[%s378 + $0x38] sm:$0xff]
        %v671 = vld [vmem:[%s378 + $0x40] sm:$0xff]
        %v672 = vld [vmem:[%s378 + $0x48] sm:$0xff]
        %v673 = vld [vmem:[%s378 + $0x50] sm:$0xff]
        %v674 = vld [vmem:[%s378 + $0x58] sm:$0xff]
        %v675 = vld [vmem:[%s378 + $0x60] sm:$0xff]
        %v676 = vld [vmem:[%s378 + $0x68] sm:$0xff]
        %v677 = vld [vmem:[%s378 + $0x70] sm:$0xff]
        %v678 = vld [vmem:[%s378 + $0x78] sm:$0xff]
        %v681 = vunpack.c.l.b16 %v661
        %v682 = vunpack.c.l.b16 %v662
        %v683 = vpack.c.b16 %v682, %v681
        %v701 = vunpack.c.l.b16 %v663
        %v702 = vunpack.c.h.b16 %v663
        %v703 = vunpack.c.l.b16 %v664
        %v704 = vunpack.c.h.b16 %v664
        %v705 = vunpack.c.l.b16 %v665
        %v706 = vunpack.c.h.b16 %v665
        %v707 = vunpack.c.l.b16 %v666
        %v708 = vunpack.c.h.b16 %v666
        %v709 = vunpack.c.l.b16 %v667
        %v710 = vunpack.c.h.b16 %v667
        %v711 = vunpack.c.l.b16 %v668
        %v712 = vunpack.c.h.b16 %v668
        %v713 = vunpack.c.l.b16 %v669
        %v714 = vunpack.c.h.b16 %v669
        %v715 = vunpack.c.l.b16 %v670
        %v716 = vunpack.c.h.b16 %v670
        %v717 = vunpack.c.l.b16 %v671
        %v718 = vunpack.c.h.b16 %v671
        %v719 = vunpack.c.l.b16 %v672
        %v720 = vunpack.c.h.b16 %v672
        %v721 = vunpack.c.l.b16 %v673
        %v722 = vunpack.c.h.b16 %v673
        %v723 = vunpack.c.l.b16 %v674
        %v724 = vunpack.c.h.b16 %v674
        %v725 = vunpack.c.l.b16 %v675
        %v726 = vunpack.c.h.b16 %v675
        %v727 = vunpack.c.l.b16 %v676
        %v728 = vunpack.c.h.b16 %v676
        %v729 = vunpack.c.l.b16 %v677
        %v730 = vunpack.c.h.b16 %v677
        %v731 = vunpack.c.l.b16 %v678
        %v732 = vunpack.c.h.b16 %v678
        %v733 = vpack.c.b16 %v703, %v701
        %v734 = vpack.c.b16 %v704, %v702
        %v735 = vpack.c.b16 %v707, %v705
        %v736 = vpack.c.b16 %v708, %v706
        %v737 = vpack.c.b16 %v711, %v709
        %v738 = vpack.c.b16 %v712, %v710
        %v739 = vpack.c.b16 %v715, %v713
        %v740 = vpack.c.b16 %v716, %v714
        %v741 = vpack.c.b16 %v719, %v717
        %v742 = vpack.c.b16 %v720, %v718
        %v743 = vpack.c.b16 %v723, %v721
        %v744 = vpack.c.b16 %v724, %v722
        %v745 = vpack.c.b16 %v727, %v725
        %v746 = vpack.c.b16 %v728, %v726
        %v747 = vpack.c.b16 %v731, %v729
        %v748 = vpack.c.b16 %v732, %v730
        %765 = vmatpush.bf16.msra.mxu0 %v747
        %766 = vmatpush.bf16.msra.mxu0 %v745
        %767 = vmatpush.bf16.msra.mxu0 %v743
        %768 = vmatpush.bf16.msra.mxu0 %v741
        %769 = vmatpush.bf16.msra.mxu0 %v739
        %770 = vmatpush.bf16.msra.mxu0 %v737
        %771 = vmatpush.bf16.msra.mxu0 %v735
        %772 = vmatpush.bf16.msra.mxu0 %v733
        %773 = vmatmul.bf16.gmra.mxu0 %v683
        %v774 = vpop.f32.mrf.mxu0
        %v775 = vadd.f32 0.0, %v774
        %v776 = vpop.f32.mrf.mxu0
        %v777 = vadd.f32 0.0, %v776
        %778 = vdwg.mxu0
        %779 = vmatpush.bf16.msra.mxu0 %v748
        %780 = vmatpush.bf16.msra.mxu0 %v746
        %781 = vmatpush.bf16.msra.mxu0 %v744
        %782 = vmatpush.bf16.msra.mxu0 %v742
        %783 = vmatpush.bf16.msra.mxu0 %v740
        %784 = vmatpush.bf16.msra.mxu0 %v738
        %785 = vmatpush.bf16.msra.mxu0 %v736
        %786 = vmatpush.bf16.msra.mxu0 %v734
        %787 = vmatmul.bf16.gmra.mxu0 %v683
        %v788 = vpop.f32.mrf.mxu0
        %v789 = vadd.f32 0.0, %v788
        %v790 = vpop.f32.mrf.mxu0
        %v791 = vadd.f32 0.0, %v790
        %792 = vdwg.mxu0
        %v793 = vadd.f32 %v654, %v775
        %v794 = vadd.f32 %v655, %v789
        %v795 = vadd.f32 %v656, %v777
        %v796 = vadd.f32 %v657, %v791
        %797 = vst [vmem:[#allocation3] sm:$0xff] %v793
        %798 = vst [vmem:[#allocation3 + $0x8] sm:$0xff] %v794
        %799 = vst [vmem:[#allocation3 + $0x10] sm:$0xff] %v795
        %800 = vst [vmem:[#allocation3 + $0x18] sm:$0xff] %v796
        %p801 = scmp.eq.s32.totalorder %s35, 1
        // Predicated region
        $region69: #{tpu_custom_call.1} parent=39 // pred_check
          %p802 = pneg %p801
        $region70: #{tpu_custom_call.1} parent=39 // pred_check_branch
          %804 = sbr.rel (%p802) target = $region72
        $region71: #{tpu_custom_call.1} parent=39 // pred_region
          %v805 = vld [vmem:[#allocation3] sm:$0xff]
          %v806 = vld [vmem:[#allocation3 + $0x8] sm:$0xff]
          %v807 = vld [vmem:[#allocation3 + $0x10] sm:$0xff]
          %v808 = vld [vmem:[#allocation3 + $0x18] sm:$0xff]
          %v809 = vld [vmem:[%s388] sm:$0x3]
          %v811 = vperm.slane %v809, 0
          %v812 = vperm.slane %v809, 1
          %v815 = vadd.f32 %v805, %v811
          %v816 = vadd.f32 %v806, %v812
          %v817 = vadd.f32 %v807, %v811
          %v818 = vadd.f32 %v808, %v812
          %v819 = vpack.c.bf16 %v816, %v815
          %v820 = vpack.c.bf16 %v818, %v817
          %821 = vst [vmem:[%s434] sm:$0xff] %v819
          %822 = vst [vmem:[%s434 + $0x8] sm:$0xff] %v820
        $region72: #{tpu_custom_call.1} parent=39 // pred_fallthru
          _
        %s823 = sand.u32 %s197, 1
        %s824 = scalar_lea.sflag [#allocation6], %s823
        %s825 = sand.u32 %s197, 1
        %s826 = smul.addr %s825, 16
        %s827 = scalar_lea.vmem [#allocation13], %s826
        // Predicated region
        $region73: #{tpu_custom_call.1} parent=39 // pred_check
          %p828 = pneg %p207
        $region74: #{tpu_custom_call.1} parent=39 // pred_check_branch
          %830 = sbr.rel (%p828) target = $region76
        $region75: #{tpu_custom_call.1} parent=39 // pred_region
          %s831 = smul.u32 2, %s33
          %s832 = smul.u32 2, %s34
          %834 = vsyncadd %s824, 0
          %s835 = smul.addr %s831, 8
          %s836 = sadd.s32 %s832, %s835
          %s837 = smul.addr %s836, 4
          %s838 = scalar_lea.hbm %s5, %s837
          %s839 = sshll.u32 %s827, 4
          %s840 = int_to_ptr.vmem [resolvable:$true] %s839
          %s841 = sshll.u32 %s838, 4
          %s842 = int_to_ptr.hbm [resolvable:$true] %s841
          %847 = dma.vmem_to_hbm [thread:$0]  %s840, 256, %s842, %s824, 128, 512, 8
        $region76: #{tpu_custom_call.1} parent=39 // pred_fallthru
          _
      $region40: #{tpu_custom_call.1} parent=5 // pred_fallthru
        _
      %p848 = scmp.le.s32.totalorder 2, %s23
      // Predicated region
      $region77: #{tpu_custom_call.1} parent=5 // pred_check
        %p849 = pneg %p848
      $region78: #{tpu_custom_call.1} parent=5 // pred_check_branch
        %851 = sbr.rel (%p849) target = $region80
      $region79: #{tpu_custom_call.1} parent=5 // pred_region
        %s852 = ssub.s32 %s23, 2
        // Predicated region
        $region81: #{tpu_custom_call.1} parent=79 // pred_check
          %p853 = pneg %p213
        $region82: #{tpu_custom_call.1} parent=79 // pred_check_branch
          %855 = sbr.rel (%p853) target = $region84
        $region83: #{tpu_custom_call.1} parent=79 // pred_region
          %s856 = sand.u32 %s198, 1
          %s857 = scalar_lea.sflag [#allocation6], %s856
          %s858 = sand.u32 %s198, 1
          %s859 = smul.addr %s858, 16
          %s860 = scalar_lea.vmem [#allocation13], %s859
          %862 = dma.done %s857, 256
        $region84: #{tpu_custom_call.1} parent=79 // pred_fallthru
          _
      $region80: #{tpu_custom_call.1} parent=5 // pred_fallthru
        _
    $region6: #{tpu_custom_call.1} parent=1 // loop_footer
      %s27 = sadd.s32 1, %s23
    $region7: #{tpu_custom_call.1} parent=1 // loop_footer_branch
      %22 = sbr.rel target = $region3
    $region8: #{tpu_custom_call.1} parent=1 // loop_exit
      _
    %863 = vsyncpa [#allocation5], 1
    %s864 = scalar_lea.sflag [#allocation5], 1
    %865 = vsyncpa %s864, 1
    %866 = vsyncpa [#allocation8], 1
    %s867 = scalar_lea.sflag [#allocation8], 1
    %868 = vsyncpa %s867, 1
    %869 = vsyncpa [#allocation11], 1
    %s870 = scalar_lea.sflag [#allocation11], 1
    %871 = vsyncpa %s870, 1
    %872 = vsyncpa [#allocation6], 1
    %s873 = scalar_lea.sflag [#allocation6], 1
    %874 = vsyncpa %s873, 1

</llo_original>
